<compile_context>
chip_gen: v7x
topology: tpu7x:2x2x1
jax: 0.10.0
libtpu: 0.0.40
codegen_flags: <defaults>
</compile_context>

<pallas_src>
import jax
import jax.numpy as jnp
from jax.experimental import pallas as pl
from jax.experimental.pallas import tpu as pltpu

LANE = 128               # lanes per vreg row
SUB = 8                  # sublanes per vreg
GRP = SUB * LANE         # elements per (8,128) group = 1024
MAX_GRP_PER_STEP = 512   # 512 * 1024 * 4B = 2 MiB f32 block per input per buffer


def _nmse_kernel(out_ref, tgt_ref, dsum_ref, tsum_ref):
    """Grid = (core, step). Accumulates sum((o-t)^2) and sum(t^2) per core.

    out_ref / tgt_ref : (grp_per_step, 8, 128) input tiles (native dtype)
    dsum_ref/tsum_ref : (1, 8, 128) output-resident f32 accumulators (per core)
    """
    step = pl.program_id(1)

    @pl.when(step == 0)
    def _():
        dsum_ref[...] = jnp.zeros_like(dsum_ref)
        tsum_ref[...] = jnp.zeros_like(tsum_ref)

    o = out_ref[...].astype(jnp.float32)
    t = tgt_ref[...].astype(jnp.float32)
    d = o - t
    # Reduce only the leading (non-layout) axis -> pure elementwise VPU adds,
    # no XLU cross-lane work and no masked single-lane store in the hot loop.
    dsum_ref[...] += jnp.sum(d * d, axis=0)[None]
    tsum_ref[...] += jnp.sum(t * t, axis=0)[None]


@jax.jit
def nmse_loss(output, target):
    assert output.shape == target.shape, "output/target shape mismatch"
    n = output.size
    itemsize = jnp.dtype(output.dtype).itemsize

    o = output.reshape(-1)   # keep native dtype; cast happens per-tile in-kernel
    t = target.reshape(-1)

    n_grp = pl.cdiv(n, GRP)

    # Split across 2 TensorCores (v7x megacore) only when each core gets at
    # least one full-size step; otherwise a degenerate "parallel" axis of 1.
    num_cores = 2 if n_grp >= 2 * MAX_GRP_PER_STEP else 1
    total_steps = num_cores * pl.cdiv(n_grp, num_cores * MAX_GRP_PER_STEP)
    grp_per_step = pl.cdiv(n_grp, total_steps)
    steps_per_core = total_steps // num_cores

    padded = grp_per_step * total_steps * GRP
    pad = padded - n
    if pad:
        # Only taken when n is not a multiple of 1024; the zero tail adds 0 to
        # both sums.  Aligned inputs skip this (no extra HBM copy).
        o = jnp.pad(o, (0, pad))
        t = jnp.pad(t, (0, pad))

    o3 = o.reshape(grp_per_step * total_steps, SUB, LANE)
    t3 = t.reshape(grp_per_step * total_steps, SUB, LANE)

    in_map = lambda p, i: (p * steps_per_core + i, 0, 0)
    out_map = lambda p, i: (p, 0, 0)

    dsums, tsums = pl.pallas_call(
        _nmse_kernel,
        out_shape=(
            jax.ShapeDtypeStruct((num_cores, SUB, LANE), jnp.float32),
            jax.ShapeDtypeStruct((num_cores, SUB, LANE), jnp.float32),
        ),
        grid=(num_cores, steps_per_core),
        in_specs=[
            pl.BlockSpec((grp_per_step, SUB, LANE), in_map),
            pl.BlockSpec((grp_per_step, SUB, LANE), in_map),
        ],
        out_specs=[
            pl.BlockSpec((1, SUB, LANE), out_map),
            pl.BlockSpec((1, SUB, LANE), out_map),
        ],
        compiler_params=pltpu.CompilerParams(
            dimension_semantics=("parallel", "arbitrary"),
            vmem_limit_bytes=32 * 1024 * 1024,
        ),
        cost_estimate=pl.CostEstimate(
            flops=5 * n,
            transcendentals=0,
            bytes_accessed=2 * n * itemsize + 2 * num_cores * GRP * 4,
        ),
    )(o3, t3)

    # Final (tiny) reduction + normalization on the XLA side.
    sum_d = jnp.sum(dsums)
    sum_t = jnp.sum(tsums)
    n_f = jnp.float32(n)          # n is a static Python int -> exact conversion
    mse = sum_d / n_f
    norm = sum_t / n_f
    return mse / (norm + jnp.float32(1e-6))


def nmse_loss_ref(output, target):
    output = output.astype(jnp.float32)
    target = target.astype(jnp.float32)
    mse = jnp.mean((output - target) ** 2)
    norm = jnp.mean(target ** 2)
    return mse / (norm + 1e-6)


if __name__ == "__main__":
    key = jax.random.PRNGKey(0)
    k1, k2, k3, k4 = jax.random.split(key, 4)

    # NCHW-style inputs consistent with a CNN fine-tuning loss: (B, C, H, W)
    shape = (2, 4, 16, 16)
    output = jax.random.normal(k1, shape, dtype=jnp.float32)
    target = jax.random.normal(k2, shape, dtype=jnp.float32)

    loss = jax.block_until_ready(nmse_loss(output, target))
    ref = jax.block_until_ready(nmse_loss_ref(output, target))
    assert jnp.allclose(loss, ref, rtol=1e-5, atol=1e-6), (loss, ref)

    # Ragged (non-multiple-of-1024) element count to exercise the padded-tail path.
    shape2 = (3, 5, 17, 19)
    output2 = jax.random.normal(k3, shape2, dtype=jnp.float32)
    target2 = jax.random.normal(k4, shape2, dtype=jnp.float32)
    loss2 = jax.block_until_ready(nmse_loss(output2, target2))
    ref2 = jax.block_until_ready(nmse_loss_ref(output2, target2))
    assert jnp.allclose(loss2, ref2, rtol=1e-5, atol=1e-6), (loss2, ref2)

    print("KERNEL_OK")
</pallas_src>

<mosaic_0001>
module attributes {stable_mosaic.version = 11 : i64} {
  func.func @_nmse_kernel(%arg0: i32, %arg1: i32, %arg2: memref<2x8x128xf32, #tpu.memory_space<vmem>>, %arg3: memref<2x8x128xf32, #tpu.memory_space<vmem>>, %arg4: memref<1x8x128xf32, #tpu.memory_space<vmem>>, %arg5: memref<1x8x128xf32, #tpu.memory_space<vmem>>) attributes {dimension_semantics = [#tpu.dimension_semantics<parallel>, #tpu.dimension_semantics<arbitrary>], iteration_bounds = array<i64: 1, 1>, scalar_prefetch = 0 : i64, scratch_operands = 0 : i64, tpu.core_type = #tpu.core_type<tc>, window_params = [{transform_indices = @transform_0, window_bounds = array<i64: 2, 8, 128>}, {transform_indices = @transform_1, window_bounds = array<i64: 2, 8, 128>}, {transform_indices = @transform_2, window_bounds = array<i64: 1, 8, 128>}, {transform_indices = @transform_3, window_bounds = array<i64: 1, 8, 128>}]} {
    %c0_i32 = arith.constant 0 : i32
    %0 = arith.cmpi eq, %arg1, %c0_i32 : i32
    %1 = arith.extui %0 : i1 to i32
    %c0_i32_0 = arith.constant 0 : i32
    %2 = arith.cmpi ne, %1, %c0_i32_0 : i32
    scf.if %2 {
      %cst_19 = arith.constant 0.000000e+00 : f32
      %18 = vector.broadcast %cst_19 : f32 to vector<1x8x128xf32>
      %c0_20 = arith.constant 0 : index
      %c0_21 = arith.constant 0 : index
      %c0_22 = arith.constant 0 : index
      %19 = vector.load %arg4[%c0_20, %c0_21, %c0_22] : memref<1x8x128xf32, #tpu.memory_space<vmem>>, vector<1x8x128xf32>
      tpu.vector_store %arg4[%c0_20, %c0_21, %c0_22], %18 {strides = array<i32>} : memref<1x8x128xf32, #tpu.memory_space<vmem>>, vector<1x8x128xf32>,
      %cst_23 = arith.constant 0.000000e+00 : f32
      %20 = vector.broadcast %cst_23 : f32 to vector<1x8x128xf32>
      %c0_24 = arith.constant 0 : index
      %c0_25 = arith.constant 0 : index
      %c0_26 = arith.constant 0 : index
      %21 = vector.load %arg5[%c0_24, %c0_25, %c0_26] : memref<1x8x128xf32, #tpu.memory_space<vmem>>, vector<1x8x128xf32>
      tpu.vector_store %arg5[%c0_24, %c0_25, %c0_26], %20 {strides = array<i32>} : memref<1x8x128xf32, #tpu.memory_space<vmem>>, vector<1x8x128xf32>,
    } else {
    }
    %c0 = arith.constant 0 : index
    %c0_1 = arith.constant 0 : index
    %c0_2 = arith.constant 0 : index
    %3 = vector.load %arg2[%c0, %c0_1, %c0_2] : memref<2x8x128xf32, #tpu.memory_space<vmem>>, vector<2x8x128xf32>
    %c0_3 = arith.constant 0 : index
    %c0_4 = arith.constant 0 : index
    %c0_5 = arith.constant 0 : index
    %4 = vector.load %arg3[%c0_3, %c0_4, %c0_5] : memref<2x8x128xf32, #tpu.memory_space<vmem>>, vector<2x8x128xf32>
    %5 = arith.subf %3, %4 : vector<2x8x128xf32>
    %c0_6 = arith.constant 0 : index
    %c0_7 = arith.constant 0 : index
    %c0_8 = arith.constant 0 : index
    %6 = vector.load %arg4[%c0_6, %c0_7, %c0_8] : memref<1x8x128xf32, #tpu.memory_space<vmem>>, vector<1x8x128xf32>
    %7 = arith.mulf %5, %5 : vector<2x8x128xf32>
    %cst = arith.constant dense<0.000000e+00> : vector<8x128xf32>
    %8 = vector.multi_reduction <add>, %7, %cst [0] : vector<2x8x128xf32> to vector<8x128xf32>
    %9 = vector.shape_cast %8 : vector<8x128xf32> to vector<1x8x128xf32>
    %10 = arith.addf %6, %9 : vector<1x8x128xf32>
    %c0_9 = arith.constant 0 : index
    %c0_10 = arith.constant 0 : index
    %c0_11 = arith.constant 0 : index
    %11 = vector.load %arg4[%c0_9, %c0_10, %c0_11] : memref<1x8x128xf32, #tpu.memory_space<vmem>>, vector<1x8x128xf32>
    tpu.vector_store %arg4[%c0_9, %c0_10, %c0_11], %10 {strides = array<i32>} : memref<1x8x128xf32, #tpu.memory_space<vmem>>, vector<1x8x128xf32>,
    %c0_12 = arith.constant 0 : index
    %c0_13 = arith.constant 0 : index
    %c0_14 = arith.constant 0 : index
    %12 = vector.load %arg5[%c0_12, %c0_13, %c0_14] : memref<1x8x128xf32, #tpu.memory_space<vmem>>, vector<1x8x128xf32>
    %13 = arith.mulf %4, %4 : vector<2x8x128xf32>
    %cst_15 = arith.constant dense<0.000000e+00> : vector<8x128xf32>
    %14 = vector.multi_reduction <add>, %13, %cst_15 [0] : vector<2x8x128xf32> to vector<8x128xf32>
    %15 = vector.shape_cast %14 : vector<8x128xf32> to vector<1x8x128xf32>
    %16 = arith.addf %12, %15 : vector<1x8x128xf32>
    %c0_16 = arith.constant 0 : index
    %c0_17 = arith.constant 0 : index
    %c0_18 = arith.constant 0 : index
    %17 = vector.load %arg5[%c0_16, %c0_17, %c0_18] : memref<1x8x128xf32, #tpu.memory_space<vmem>>, vector<1x8x128xf32>
    tpu.vector_store %arg5[%c0_16, %c0_17, %c0_18], %16 {strides = array<i32>} : memref<1x8x128xf32, #tpu.memory_space<vmem>>, vector<1x8x128xf32>,
    return
  }
  func.func @transform_0(%arg0: i32, %arg1: i32) -> (i32, i32, i32) {
    %c1_i32 = arith.constant 1 : i32
    %0 = arith.muli %arg0, %c1_i32 : i32
    %1 = arith.addi %0, %arg1 : i32
    %c0_i32 = arith.constant 0 : i32
    %c0_i32_0 = arith.constant 0 : i32
    %c0_i32_1 = arith.constant 0 : i32
    return %1, %c0_i32, %c0_i32_0 : i32, i32, i32
  }
  func.func @transform_1(%arg0: i32, %arg1: i32) -> (i32, i32, i32) {
    %c1_i32 = arith.constant 1 : i32
    %0 = arith.muli %arg0, %c1_i32 : i32
    %1 = arith.addi %0, %arg1 : i32
    %c0_i32 = arith.constant 0 : i32
    %c0_i32_0 = arith.constant 0 : i32
    %c0_i32_1 = arith.constant 0 : i32
    return %1, %c0_i32, %c0_i32_0 : i32, i32, i32
  }
  func.func @transform_2(%arg0: i32, %arg1: i32) -> (i32, i32, i32) {
    %c0_i32 = arith.constant 0 : i32
    %c0_i32_0 = arith.constant 0 : i32
    %c0_i32_1 = arith.constant 0 : i32
    return %arg0, %c0_i32, %c0_i32_0 : i32, i32, i32
  }
  func.func @transform_3(%arg0: i32, %arg1: i32) -> (i32, i32, i32) {
    %c0_i32 = arith.constant 0 : i32
    %c0_i32_0 = arith.constant 0 : i32
    %c0_i32_1 = arith.constant 0 : i32
    return %arg0, %c0_i32, %c0_i32_0 : i32, i32, i32
  }
}

</mosaic_0001>

<llo_original>
// kernel: nmse_loss.1
$region0: #{nmse_loss.1}
  #allocation0 [shape = 'u32[]', space=smem, size = 0x4, offset = 0x4, fixed_abs, tag = 'smem constant byte address 0x4 - core index']
  #allocation1 [shape = 'u32[144,128]{1,0:T(1,128)}', space=vmem, size = 0x12000, scoped, tag = 'internal scratch']
  %s0 = inlined_call_operand.vmem [shape: f32[2,8,128], index: 0, kind: input, shape index: {}]
  %s1 = inlined_call_operand.vmem [shape: f32[2,8,128], index: 1, kind: input, shape index: {}]
  %s2 = inlined_call_operand.vmem [shape: f32[1,8,128], index: 2, kind: output, shape index: {0}]
  %s3 = inlined_call_operand.vmem [shape: f32[1,8,128], index: 3, kind: output, shape index: {1}]
  %4 = xla_tuple %s2, %s3
  %s5 = sld [smem:[#allocation0]]
  $region30: #{nmse_loss.1} parent=0
    _
  %s7 = ssub.s32 1, %s5
  %s8 = scalar_select 0, %s7, %s5
  // Predicated region
  $region2: #{nmse_loss.1} parent=0 // pred_check
    _
  $region3: #{nmse_loss.1} parent=0 // pred_check_branch
    %10 = sbr.rel (0) target = $region5
  $region4: #{nmse_loss.1} parent=0 // pred_region
    %s11 = sadd.s32 0, 0
    %s12 = smul.u32 2, %s11
    %p13 = scmp.lt.s32.totalorder %s12, 1
    %s14 = scalar_select %p13, %s12, 1
    %s15 = smul.addr %s14, 8
    %s16 = scalar_lea.vmem %s0, %s15
    %s17 = sadd.s32 0, 0
    %s18 = smul.u32 2, %s17
  $region5: #{nmse_loss.1} parent=0 // pred_fallthru
    _
  // Predicated region
  $region6: #{nmse_loss.1} parent=0 // pred_check
    _
  $region7: #{nmse_loss.1} parent=0 // pred_check_branch
    %20 = sbr.rel (0) target = $region9
  $region8: #{nmse_loss.1} parent=0 // pred_region
    %s21 = sadd.s32 0, 0
    %s22 = smul.u32 2, %s21
    %p23 = scmp.lt.s32.totalorder %s22, 1
    %s24 = scalar_select %p23, %s22, 1
    %s25 = smul.addr %s24, 8
    %s26 = scalar_lea.vmem %s1, %s25
    %s27 = sadd.s32 0, 0
    %s28 = smul.u32 2, %s27
  $region9: #{nmse_loss.1} parent=0 // pred_fallthru
    _
  %s29 = sadd.s32 0, 0
  %s30 = smul.u32 2, %s29
  %p31 = scmp.lt.s32.totalorder %s30, 1
  %s32 = scalar_select %p31, %s30, 1
  %s33 = smul.addr %s32, 8
  %s34 = scalar_lea.vmem %s0, %s33
  %s35 = sadd.s32 0, 0
  %s36 = smul.u32 2, %s35
  %p37 = scmp.lt.s32.totalorder %s36, 1
  %s38 = scalar_select %p37, %s36, 1
  %s39 = smul.addr %s38, 8
  %s40 = scalar_lea.vmem %s1, %s39
  %s41 = sadd.s32 0, 0
  %s42 = smul.u32 2, %s41
  %p43 = scmp.lt.s32.totalorder %s42, 1
  %s44 = scalar_select %p43, %s42, 1
  %s45 = smul.addr %s44, 8
  %s46 = scalar_lea.vmem %s0, %s45
  %s47 = sadd.s32 0, 0
  %s48 = smul.u32 2, %s47
  %s49 = sadd.s32 0, 0
  %s50 = smul.u32 2, %s49
  %p51 = scmp.lt.s32.totalorder %s50, 1
  %s52 = scalar_select %p51, %s50, 1
  %s53 = smul.addr %s52, 8
  %s54 = scalar_lea.vmem %s1, %s53
  %s55 = sadd.s32 0, 0
  %s56 = smul.u32 2, %s55
  %p57 = scmp.eq.s32.totalorder 0, 0
  // Predicated region
  $region10: #{nmse_loss.1} parent=0 // pred_check
    %p58 = pneg %p57
  $region11: #{nmse_loss.1} parent=0 // pred_check_branch
    %60 = sbr.rel (%p58) target = $region13
  $region12: #{nmse_loss.1} parent=0 // pred_region
    %61 = vst [vmem:[%s2] sm:$0xff] 0.0
    %62 = vst [vmem:[%s3] sm:$0xff] 0.0
  $region13: #{nmse_loss.1} parent=0 // pred_fallthru
    _
  %v63 = vld [vmem:[%s46] sm:$0xff]
  %v64 = vld [vmem:[%s46 + $0x8] sm:$0xff]
  %v65 = vld [vmem:[%s54] sm:$0xff]
  %v66 = vld [vmem:[%s54 + $0x8] sm:$0xff]
  %v67 = vsub.f32 %v63, %v65
  %v68 = vsub.f32 %v64, %v66
  %v69 = vld [vmem:[%s2] sm:$0xff]
  %v70 = vmul.f32 %v67, %v67
  %v71 = vmul.f32 %v68, %v68
  %v72 = vadd.f32 %v70, %v71
  %v73 = vadd.f32 %v69, %v72
  %74 = vst [vmem:[%s2] sm:$0xff] %v73
  %v75 = vld [vmem:[%s3] sm:$0xff]
  %v76 = vmul.f32 %v65, %v65
  %v77 = vmul.f32 %v66, %v66
  %v78 = vadd.f32 %v76, %v77
  %v79 = vadd.f32 %v75, %v78
  %80 = vst [vmem:[%s3] sm:$0xff] %v79
  // Predicated region
  $region14: #{nmse_loss.1} parent=0 // pred_check
    _
  $region15: #{nmse_loss.1} parent=0 // pred_check_branch
    %82 = sbr.rel (0) target = $region17
  $region16: #{nmse_loss.1} parent=0 // pred_region
    _
  $region17: #{nmse_loss.1} parent=0 // pred_fallthru
    _
  // Predicated region
  $region18: #{nmse_loss.1} parent=0 // pred_check
    _
  $region19: #{nmse_loss.1} parent=0 // pred_check_branch
    %84 = sbr.rel (0) target = $region21
  $region20: #{nmse_loss.1} parent=0 // pred_region
    _
  $region21: #{nmse_loss.1} parent=0 // pred_fallthru
    _
  // Predicated region
  $region22: #{nmse_loss.1} parent=0 // pred_check
    _
  $region23: #{nmse_loss.1} parent=0 // pred_check_branch
    %86 = sbr.rel (0) target = $region25
  $region24: #{nmse_loss.1} parent=0 // pred_region
    _
  $region25: #{nmse_loss.1} parent=0 // pred_fallthru
    _
  // Predicated region
  $region26: #{nmse_loss.1} parent=0 // pred_check
    _
  $region27: #{nmse_loss.1} parent=0 // pred_check_branch
    %88 = sbr.rel (0) target = $region29
  $region28: #{nmse_loss.1} parent=0 // pred_region
    _
  $region29: #{nmse_loss.1} parent=0 // pred_fallthru
    _

</llo_original>
